<compile_context>
chip_gen: v7x
topology: tpu7x:2x2x1
jax: 0.10.0
libtpu: 0.0.40
codegen_flags: <defaults>
</compile_context>

<pallas_src>
import functools

import jax
import jax.numpy as jnp
from jax import lax
from jax.experimental import pallas as pl
from jax.experimental.pallas import tpu as pltpu


_SLOPE = 0.01       # F.leaky_relu default negative slope
_SLAB_W = 128       # lane-dense packed-output width


def _leaky_relu(v):
    return jnp.where(v > 0, v, _SLOPE * v)


def gru_discrete_policy_seq_kernel(
    # inputs
    x_ref, u_ref, h0_ref,
    w1t_ref, b1_ref,
    w2t_ref, b2_ref,
    wgt_ref, bg_ref,        # fused block-diagonal GRU weight / concatenated bias
    w3t_ref, b3_ref,
    # outputs
    slab_ref,               # (B, 128) lane-dense packed per-step outputs
    hfin_ref,               # (B, H) resident hidden-state carry / final hidden
    *, hidden_dim: int, out_dim: int,
):
    t = pl.program_id(0)
    H = hidden_dim
    O = out_dim

    # Initialize the resident hidden-state carry from h0 on the first step.
    @pl.when(t == 0)
    def _():
        hfin_ref[...] = h0_ref[...]

    x = x_ref[...]            # [B, input_dim]
    u = u_ref[...]            # [B, 1] uniform(0,1)
    h_prev = hfin_ref[...]    # [B, H]

    # fc1 -> leaky_relu ; fc2 -> leaky_relu
    h1 = _leaky_relu(
        jnp.dot(x, w1t_ref[...], preferred_element_type=jnp.float32) + b1_ref[...]
    )
    h2 = _leaky_relu(
        jnp.dot(h1, w2t_ref[...], preferred_element_type=jnp.float32) + b2_ref[...]
    )

    # Fused GRUCell gate matmul:
    #   [h2 | h_prev] @ [[W_ih^T, 0], [0, W_hh^T]] = [gi | gh]   (B, 6H)
    hcat = jnp.concatenate([h2, h_prev], axis=-1)                # (B, 2H)
    g = jnp.dot(hcat, wgt_ref[...], preferred_element_type=jnp.float32) + bg_ref[...]
    gi_r, gi_z, gi_n = g[:, 0:H], g[:, H:2 * H], g[:, 2 * H:3 * H]
    gh_r, gh_z, gh_n = g[:, 3 * H:4 * H], g[:, 4 * H:5 * H], g[:, 5 * H:6 * H]
    r = jax.nn.sigmoid(gi_r + gh_r)
    z = jax.nn.sigmoid(gi_z + gh_z)
    n = jnp.tanh(gi_n + r * gh_n)
    h_new = (1.0 - z) * n + z * h_prev
    hfin_ref[...] = h_new     # carry for next grid step / final output

    # fc3 -> leaky_relu
    out = _leaky_relu(
        jnp.dot(h_new, w3t_ref[...], preferred_element_type=jnp.float32) + b3_ref[...]
    )
    B = out.shape[0]

    # softmax / log_softmax along dim=1 (numerically stable; divide on EUP)
    m = jnp.max(out, axis=-1, keepdims=True)
    e = jnp.exp(out - m)
    s = jnp.sum(e, axis=-1, keepdims=True)
    inv_s = pl.reciprocal(s, approx=True)
    probs = e * inv_s
    log_probs = (out - m) - jnp.log(s)

    # Categorical sample via inverse CDF, unrolled prefix-sum on the VPU
    # (no MXU round trip): int_act = #{j < O-1 : u > cdf_j}  in [0, O-1].
    int_act = jnp.zeros((B, 1), jnp.int32)
    running = jnp.zeros((B, 1), jnp.float32)
    for j in range(O - 1):
        running = running + probs[:, j:j + 1]
        int_act = int_act + (u > running).astype(jnp.int32)

    col = lax.broadcasted_iota(jnp.int32, (B, O), 1)
    act = (col == int_act).astype(jnp.float32)                   # one-hot action
    log_pi = jnp.sum(log_probs * act, axis=-1, keepdims=True)    # (B, 1)

    # Single lane-dense packed store:
    # [ act(O) | probs(O) | log_probs(O) | out(O) | int_act(1) | log_pi(1) | 0-pad ]
    pad = jnp.zeros((B, _SLAB_W - (4 * O + 2)), jnp.float32)
    slab_ref[...] = jnp.concatenate(
        [act, probs, log_probs, out, int_act.astype(jnp.float32), log_pi, pad],
        axis=-1,
    )


def init_params(key, input_dim, out_dim, hidden_dim):
    """PyTorch-style uniform(-1/sqrt(fan_in), 1/sqrt(fan_in)) init.

    Weights are stored already transposed (and the GRU projections fused into one
    block-diagonal matrix) so the forward wrapper does zero per-call transposes.
    """
    ks = jax.random.split(key, 10)
    H = hidden_dim

    def uni(k, shape, fan_in):
        bound = 1.0 / jnp.sqrt(jnp.float32(fan_in))
        return jax.random.uniform(k, shape, jnp.float32, -bound, bound)

    w1 = uni(ks[0], (H, input_dim), input_dim)
    b1 = uni(ks[1], (1, H), input_dim)
    w2 = uni(ks[2], (H, H), H)
    b2 = uni(ks[3], (1, H), H)
    w_ih = uni(ks[4], (3 * H, H), H)
    b_ih = uni(ks[5], (1, 3 * H), H)
    w_hh = uni(ks[6], (3 * H, H), H)
    b_hh = uni(ks[7], (1, 3 * H), H)
    w3 = uni(ks[8], (out_dim, H), H)
    b3 = uni(ks[9], (1, out_dim), H)

    # Fused block-diagonal GRU weight: (2H, 6H) -> [gi | gh] in one matmul.
    wgt = jnp.zeros((2 * H, 6 * H), jnp.float32)
    wgt = wgt.at[:H, :3 * H].set(w_ih.T)
    wgt = wgt.at[H:, 3 * H:].set(w_hh.T)
    bg = jnp.concatenate([b_ih, b_hh], axis=-1)   # (1, 6H)

    return dict(
        w1t=w1.T, b1=b1,
        w2t=w2.T, b2=b2,
        wgt=wgt, bg=bg,
        w3t=w3.T, b3=b3,
    )


def gru_discrete_policy_forward_seq(obs_seq, u_seq, h0, params, *, hidden_dim, out_dim):
    """Runs T GRU-policy steps in ONE pallas_call (grid over T, state carried in VMEM).

    Returns per-step: (act, int_act, probs, log_pi, entropy, reg) each with a leading
    T axis, plus the final hidden state h_final.
    """
    T, B, IN = obs_seq.shape
    H = hidden_dim
    O = out_dim

    kernel = functools.partial(
        gru_discrete_policy_seq_kernel, hidden_dim=H, out_dim=O
    )

    def resident(a):  # full-array block, constant index map -> DMA'd once, VMEM-resident
        return pl.BlockSpec(a.shape, lambda t: (0, 0))

    in_specs = [
        pl.BlockSpec((pl.Squeezed(), B, IN), lambda t: (t, 0, 0)),   # obs step t
        pl.BlockSpec((pl.Squeezed(), B, 1), lambda t: (t, 0, 0)),    # uniform step t
        pl.BlockSpec((B, H), lambda t: (0, 0)),                      # h0 (read at t==0)
        resident(params["w1t"]), resident(params["b1"]),
        resident(params["w2t"]), resident(params["b2"]),
        resident(params["wgt"]), resident(params["bg"]),
        resident(params["w3t"]), resident(params["b3"]),
    ]
    out_specs = (
        pl.BlockSpec((pl.Squeezed(), B, _SLAB_W), lambda t: (t, 0, 0)),  # packed slab
        pl.BlockSpec((B, H), lambda t: (0, 0)),                          # final hidden
    )
    out_shapes = (
        jax.ShapeDtypeStruct((T, B, _SLAB_W), jnp.float32),
        jax.ShapeDtypeStruct((B, H), jnp.float32),
    )

    slab, h_final = pl.pallas_call(
        kernel,
        grid=(T,),
        in_specs=in_specs,
        out_specs=out_specs,
        out_shape=out_shapes,
        compiler_params=pltpu.CompilerParams(
            # T carries the GRU state sequentially -> must be "arbitrary".
            # (A batch-parallel axis for v7x's 2 TCs only pays off at large B.)
            dimension_semantics=("arbitrary",),
            vmem_limit_bytes=16 * 1024 * 1024,   # footprint is well under 1 MiB
        ),
    )(
        obs_seq, u_seq, h0,
        params["w1t"], params["b1"],
        params["w2t"], params["b2"],
        params["wgt"], params["bg"],
        params["w3t"], params["b3"],
    )

    # Split the lane-dense slab; derive scalar reductions in the wrapper (cheap XLA).
    act = slab[:, :, 0:O]
    probs = slab[:, :, O:2 * O]
    log_probs = slab[:, :, 2 * O:3 * O]
    out = slab[:, :, 3 * O:4 * O]
    int_act = slab[:, :, 4 * O:4 * O + 1].astype(jnp.int32)
    log_pi = slab[:, :, 4 * O + 1:4 * O + 2]
    entropy = -jnp.mean(jnp.sum(log_probs * probs, axis=-1), axis=-1)   # (T,)
    reg = jnp.mean(out * out, axis=(1, 2))                              # (T,)
    return act, int_act, probs, log_pi, entropy, reg, h_final


if __name__ == "__main__":
    # Small shapes consistent with the module: a short rollout of agent observations.
    T = 8            # fused time steps per pallas_call
    B = 8            # batch (n_agents * threads)
    INPUT_DIM = 20   # observation dim
    OUT_DIM = 5      # discrete action dim
    HIDDEN_DIM = 32

    key = jax.random.PRNGKey(0)
    k_params, k_obs, k_u = jax.random.split(key, 3)

    params = init_params(k_params, INPUT_DIM, OUT_DIM, HIDDEN_DIM)
    obs_seq = jax.random.normal(k_obs, (T, B, INPUT_DIM), jnp.float32)
    u_seq = jax.random.uniform(k_u, (T, B, 1), jnp.float32)   # randomness for sampling
    h0 = jnp.zeros((B, HIDDEN_DIM), jnp.float32)              # init_hidden_state (zeros)

    fwd = jax.jit(functools.partial(
        gru_discrete_policy_forward_seq, hidden_dim=HIDDEN_DIM, out_dim=OUT_DIM))

    act, int_act, probs, log_pi, entropy, reg, h_final = jax.block_until_ready(
        fwd(obs_seq, u_seq, h0, params)
    )

    # light sanity checks
    assert act.shape == (T, B, OUT_DIM)
    assert jnp.allclose(jnp.sum(act, axis=-1), 1.0)
    assert jnp.allclose(jnp.sum(probs, axis=-1), 1.0, atol=1e-2)  # approx reciprocal
    assert bool(jnp.all((int_act >= 0) & (int_act < OUT_DIM)))
    assert log_pi.shape == (T, B, 1) and bool(jnp.all(log_pi <= 0.0))
    assert entropy.shape == (T,) and bool(jnp.isfinite(entropy).all())
    assert reg.shape == (T,) and bool(jnp.isfinite(reg).all())
    assert h_final.shape == (B, HIDDEN_DIM)

    print("KERNEL_OK")
</pallas_src>

<mosaic_0001>
module attributes {stable_mosaic.version = 11 : i64} {
  func.func @gru_discrete_policy_seq_kernel(%arg0: i32, %arg1: memref<1x8x20xf32, #tpu.memory_space<vmem>>, %arg2: memref<1x8x1xf32, #tpu.memory_space<vmem>>, %arg3: memref<8x32xf32, #tpu.memory_space<vmem>>, %arg4: memref<20x32xf32, #tpu.memory_space<vmem>>, %arg5: memref<1x32xf32, #tpu.memory_space<vmem>>, %arg6: memref<32x32xf32, #tpu.memory_space<vmem>>, %arg7: memref<1x32xf32, #tpu.memory_space<vmem>>, %arg8: memref<64x192xf32, #tpu.memory_space<vmem>>, %arg9: memref<1x192xf32, #tpu.memory_space<vmem>>, %arg10: memref<32x5xf32, #tpu.memory_space<vmem>>, %arg11: memref<1x5xf32, #tpu.memory_space<vmem>>, %arg12: memref<1x8x128xf32, #tpu.memory_space<vmem>>, %arg13: memref<8x32xf32, #tpu.memory_space<vmem>>) attributes {dimension_semantics = [#tpu.dimension_semantics<arbitrary>], iteration_bounds = array<i64: 8>, scalar_prefetch = 0 : i64, scratch_operands = 0 : i64, tpu.core_type = #tpu.core_type<tc>, window_params = [{transform_indices = @transform_0, window_bounds = array<i64: 1, 8, 20>}, {transform_indices = @transform_1, window_bounds = array<i64: 1, 8, 1>}, {pipeline_mode = #tpu.pipeline_mode<synchronous>, transform_indices = @transform_2, window_bounds = array<i64: 8, 32>}, {pipeline_mode = #tpu.pipeline_mode<synchronous>, transform_indices = @transform_3, window_bounds = array<i64: 20, 32>}, {pipeline_mode = #tpu.pipeline_mode<synchronous>, transform_indices = @transform_4, window_bounds = array<i64: 1, 32>}, {pipeline_mode = #tpu.pipeline_mode<synchronous>, transform_indices = @transform_5, window_bounds = array<i64: 32, 32>}, {pipeline_mode = #tpu.pipeline_mode<synchronous>, transform_indices = @transform_6, window_bounds = array<i64: 1, 32>}, {pipeline_mode = #tpu.pipeline_mode<synchronous>, transform_indices = @transform_7, window_bounds = array<i64: 64, 192>}, {pipeline_mode = #tpu.pipeline_mode<synchronous>, transform_indices = @transform_8, window_bounds = array<i64: 1, 192>}, {pipeline_mode = #tpu.pipeline_mode<synchronous>, transform_indices = @transform_9, window_bounds = array<i64: 32, 5>}, {pipeline_mode = #tpu.pipeline_mode<synchronous>, transform_indices = @transform_10, window_bounds = array<i64: 1, 5>}, {transform_indices = @transform_11, window_bounds = array<i64: 1, 8, 128>}, {pipeline_mode = #tpu.pipeline_mode<synchronous>, transform_indices = @transform_12, window_bounds = array<i64: 8, 32>}]} {
    %c0_i32 = arith.constant 0 : i32
    %0 = arith.cmpi eq, %arg0, %c0_i32 : i32
    %1 = arith.extui %0 : i1 to i32
    %c0_i32_0 = arith.constant 0 : i32
    %2 = arith.cmpi ne, %1, %c0_i32_0 : i32
    scf.if %2 {
      %c0_47 = arith.constant 0 : index
      %c0_48 = arith.constant 0 : index
      %122 = vector.load %arg3[%c0_47, %c0_48] : memref<8x32xf32, #tpu.memory_space<vmem>>, vector<8x32xf32>
      %c0_49 = arith.constant 0 : index
      %c0_50 = arith.constant 0 : index
      %123 = vector.load %arg13[%c0_49, %c0_50] : memref<8x32xf32, #tpu.memory_space<vmem>>, vector<8x32xf32>
      tpu.vector_store %arg13[%c0_49, %c0_50], %122 {strides = array<i32>} : memref<8x32xf32, #tpu.memory_space<vmem>>, vector<8x32xf32>,
    } else {
    }
    %c0 = arith.constant 0 : index
    %c0_1 = arith.constant 0 : index
    %c0_2 = arith.constant 0 : index
    %3 = vector.load %arg1[%c0, %c0_1, %c0_2] : memref<1x8x20xf32, #tpu.memory_space<vmem>>, vector<1x8x20xf32>
    %4 = vector.shape_cast %3 : vector<1x8x20xf32> to vector<8x20xf32>
    %c0_3 = arith.constant 0 : index
    %c0_4 = arith.constant 0 : index
    %c0_5 = arith.constant 0 : index
    %5 = vector.load %arg2[%c0_3, %c0_4, %c0_5] : memref<1x8x1xf32, #tpu.memory_space<vmem>>, vector<1x8x1xf32>
    %6 = vector.shape_cast %5 : vector<1x8x1xf32> to vector<8x1xf32>
    %c0_6 = arith.constant 0 : index
    %c0_7 = arith.constant 0 : index
    %7 = vector.load %arg13[%c0_6, %c0_7] : memref<8x32xf32, #tpu.memory_space<vmem>>, vector<8x32xf32>
    %c0_8 = arith.constant 0 : index
    %c0_9 = arith.constant 0 : index
    %8 = vector.load %arg4[%c0_8, %c0_9] : memref<20x32xf32, #tpu.memory_space<vmem>>, vector<20x32xf32>
    %cst = arith.constant dense<0.000000e+00> : vector<8x32xf32>
    %9 = tpu.matmul %4, %8, %cst {dimension_numbers = #tpu.dot_dimension_numbers<[1], [0], [0], [1], [0, 0, 1, 1], [], []>} : vector<8x20xf32>, vector<20x32xf32>, vector<8x32xf32> -> vector<8x32xf32>
    %c0_10 = arith.constant 0 : index
    %c0_11 = arith.constant 0 : index
    %10 = vector.load %arg5[%c0_10, %c0_11] : memref<1x32xf32, #tpu.memory_space<vmem>>, vector<1x32xf32>
    %11 = vector.broadcast %10 : vector<1x32xf32> to vector<8x32xf32>
    %12 = arith.addf %9, %11 : vector<8x32xf32>
    %cst_12 = arith.constant 0.000000e+00 : f32
    %13 = vector.broadcast %cst_12 : f32 to vector<8x32xf32>
    %14 = arith.cmpf ogt, %12, %13 : vector<8x32xf32>
    %cst_13 = arith.constant 0.00999999977 : f32
    %15 = vector.broadcast %cst_13 : f32 to vector<8x32xf32>
    %16 = arith.mulf %15, %12 : vector<8x32xf32>
    %17 = arith.select %14, %12, %16 : vector<8x32xi1>, vector<8x32xf32>
    %c0_14 = arith.constant 0 : index
    %c0_15 = arith.constant 0 : index
    %18 = vector.load %arg6[%c0_14, %c0_15] : memref<32x32xf32, #tpu.memory_space<vmem>>, vector<32x32xf32>
    %cst_16 = arith.constant dense<0.000000e+00> : vector<8x32xf32>
    %19 = tpu.matmul %17, %18, %cst_16 {dimension_numbers = #tpu.dot_dimension_numbers<[1], [0], [0], [1], [0, 0, 1, 1], [], []>} : vector<8x32xf32>, vector<32x32xf32>, vector<8x32xf32> -> vector<8x32xf32>
    %c0_17 = arith.constant 0 : index
    %c0_18 = arith.constant 0 : index
    %20 = vector.load %arg7[%c0_17, %c0_18] : memref<1x32xf32, #tpu.memory_space<vmem>>, vector<1x32xf32>
    %21 = vector.broadcast %20 : vector<1x32xf32> to vector<8x32xf32>
    %22 = arith.addf %19, %21 : vector<8x32xf32>
    %cst_19 = arith.constant 0.000000e+00 : f32
    %23 = vector.broadcast %cst_19 : f32 to vector<8x32xf32>
    %24 = arith.cmpf ogt, %22, %23 : vector<8x32xf32>
    %cst_20 = arith.constant 0.00999999977 : f32
    %25 = vector.broadcast %cst_20 : f32 to vector<8x32xf32>
    %26 = arith.mulf %25, %22 : vector<8x32xf32>
    %27 = arith.select %24, %22, %26 : vector<8x32xi1>, vector<8x32xf32>
    %28 = tpu.concatenate %27, %7 in 1 : vector<8x32xf32>, vector<8x32xf32> -> vector<8x64xf32>
    %c0_21 = arith.constant 0 : index
    %c0_22 = arith.constant 0 : index
    %29 = vector.load %arg8[%c0_21, %c0_22] : memref<64x192xf32, #tpu.memory_space<vmem>>, vector<64x192xf32>
    %cst_23 = arith.constant dense<0.000000e+00> : vector<8x192xf32>
    %30 = tpu.matmul %28, %29, %cst_23 {dimension_numbers = #tpu.dot_dimension_numbers<[1], [0], [0], [1], [0, 0, 1, 1], [], []>} : vector<8x64xf32>, vector<64x192xf32>, vector<8x192xf32> -> vector<8x192xf32>
    %c0_24 = arith.constant 0 : index
    %c0_25 = arith.constant 0 : index
    %31 = vector.load %arg9[%c0_24, %c0_25] : memref<1x192xf32, #tpu.memory_space<vmem>>, vector<1x192xf32>
    %32 = vector.broadcast %31 : vector<1x192xf32> to vector<8x192xf32>
    %33 = arith.addf %30, %32 : vector<8x192xf32>
    %34 = vector.extract_strided_slice %33 {offsets = [0, 0], sizes = [8, 32], strides = [1, 1]} : vector<8x192xf32> to vector<8x32xf32>
    %35 = vector.extract_strided_slice %33 {offsets = [0, 32], sizes = [8, 32], strides = [1, 1]} : vector<8x192xf32> to vector<8x32xf32>
    %36 = vector.extract_strided_slice %33 {offsets = [0, 64], sizes = [8, 32], strides = [1, 1]} : vector<8x192xf32> to vector<8x32xf32>
    %37 = vector.extract_strided_slice %33 {offsets = [0, 96], sizes = [8, 32], strides = [1, 1]} : vector<8x192xf32> to vector<8x32xf32>
    %38 = vector.extract_strided_slice %33 {offsets = [0, 128], sizes = [8, 32], strides = [1, 1]} : vector<8x192xf32> to vector<8x32xf32>
    %39 = vector.extract_strided_slice %33 {offsets = [0, 160], sizes = [8, 32], strides = [1, 1]} : vector<8x192xf32> to vector<8x32xf32>
    %40 = arith.addf %34, %37 : vector<8x32xf32>
    %41 = arith.negf %40 : vector<8x32xf32>
    %42 = math.exp %41 : vector<8x32xf32>
    %cst_26 = arith.constant 1.000000e+00 : f32
    %43 = vector.broadcast %cst_26 : f32 to vector<8x32xf32>
    %44 = arith.addf %43, %42 : vector<8x32xf32>
    %45 = arith.divf %43, %44 : vector<8x32xf32>
    %46 = arith.addf %35, %38 : vector<8x32xf32>
    %47 = arith.negf %46 : vector<8x32xf32>
    %48 = math.exp %47 : vector<8x32xf32>
    %cst_27 = arith.constant 1.000000e+00 : f32
    %49 = vector.broadcast %cst_27 : f32 to vector<8x32xf32>
    %50 = arith.addf %49, %48 : vector<8x32xf32>
    %51 = arith.divf %49, %50 : vector<8x32xf32>
    %52 = arith.mulf %45, %39 : vector<8x32xf32>
    %53 = arith.addf %36, %52 : vector<8x32xf32>
    %54 = math.tanh %53 : vector<8x32xf32>
    %cst_28 = arith.constant 1.000000e+00 : f32
    %55 = vector.broadcast %cst_28 : f32 to vector<8x32xf32>
    %56 = arith.subf %55, %51 : vector<8x32xf32>
    %57 = arith.mulf %56, %54 : vector<8x32xf32>
    %58 = arith.mulf %51, %7 : vector<8x32xf32>
    %59 = arith.addf %57, %58 : vector<8x32xf32>
    %c0_29 = arith.constant 0 : index
    %c0_30 = arith.constant 0 : index
    %60 = vector.load %arg13[%c0_29, %c0_30] : memref<8x32xf32, #tpu.memory_space<vmem>>, vector<8x32xf32>
    tpu.vector_store %arg13[%c0_29, %c0_30], %59 {strides = array<i32>} : memref<8x32xf32, #tpu.memory_space<vmem>>, vector<8x32xf32>,
    %c0_31 = arith.constant 0 : index
    %c0_32 = arith.constant 0 : index
    %61 = vector.load %arg10[%c0_31, %c0_32] : memref<32x5xf32, #tpu.memory_space<vmem>>, vector<32x5xf32>
    %cst_33 = arith.constant dense<0.000000e+00> : vector<8x5xf32>
    %62 = tpu.matmul %59, %61, %cst_33 {dimension_numbers = #tpu.dot_dimension_numbers<[1], [0], [0], [1], [0, 0, 1, 1], [], []>} : vector<8x32xf32>, vector<32x5xf32>, vector<8x5xf32> -> vector<8x5xf32>
    %c0_34 = arith.constant 0 : index
    %c0_35 = arith.constant 0 : index
    %63 = vector.load %arg11[%c0_34, %c0_35] : memref<1x5xf32, #tpu.memory_space<vmem>>, vector<1x5xf32>
    %64 = vector.broadcast %63 : vector<1x5xf32> to vector<8x5xf32>
    %65 = arith.addf %62, %64 : vector<8x5xf32>
    %cst_36 = arith.constant 0.000000e+00 : f32
    %66 = vector.broadcast %cst_36 : f32 to vector<8x5xf32>
    %67 = arith.cmpf ogt, %65, %66 : vector<8x5xf32>
    %cst_37 = arith.constant 0.00999999977 : f32
    %68 = vector.broadcast %cst_37 : f32 to vector<8x5xf32>
    %69 = arith.mulf %68, %65 : vector<8x5xf32>
    %70 = arith.select %67, %65, %69 : vector<8x5xi1>, vector<8x5xf32>
    %cst_38 = arith.constant dense<0xFF800000> : vector<8xf32>
    %71 = vector.multi_reduction <maximumf>, %70, %cst_38 [1] : vector<8x5xf32> to vector<8xf32>
    %72 = vector.shape_cast %71 : vector<8xf32> to vector<8x1xf32>
    %73 = vector.broadcast %72 : vector<8x1xf32> to vector<8x5xf32>
    %74 = arith.subf %70, %73 : vector<8x5xf32>
    %75 = math.exp %74 : vector<8x5xf32>
    %cst_39 = arith.constant dense<0.000000e+00> : vector<8xf32>
    %76 = vector.multi_reduction <add>, %75, %cst_39 [1] : vector<8x5xf32> to vector<8xf32>
    %77 = vector.shape_cast %76 : vector<8xf32> to vector<8x1xf32>
    %78 = tpu.reciprocal %77 {approx = true} : vector<8x1xf32> -> vector<8x1xf32>
    %79 = vector.broadcast %78 : vector<8x1xf32> to vector<8x5xf32>
    %80 = arith.mulf %75, %79 : vector<8x5xf32>
    %81 = vector.broadcast %72 : vector<8x1xf32> to vector<8x5xf32>
    %82 = arith.subf %70, %81 : vector<8x5xf32>
    %83 = math.log %77 : vector<8x1xf32>
    %84 = vector.broadcast %83 : vector<8x1xf32> to vector<8x5xf32>
    %85 = arith.subf %82, %84 : vector<8x5xf32>
    %c0_i32_40 = arith.constant 0 : i32
    %86 = vector.broadcast %c0_i32_40 : i32 to vector<8x1xi32>
    %cst_41 = arith.constant 0.000000e+00 : f32
    %87 = vector.broadcast %cst_41 : f32 to vector<8x1xf32>
    %88 = vector.extract_strided_slice %80 {offsets = [0, 0], sizes = [8, 1], strides = [1, 1]} : vector<8x5xf32> to vector<8x1xf32>
    %89 = arith.addf %87, %88 : vector<8x1xf32>
    %90 = arith.cmpf ogt, %6, %89 : vector<8x1xf32>
    %91 = arith.extui %90 : vector<8x1xi1> to vector<8x1xi32>
    %92 = arith.addi %86, %91 : vector<8x1xi32>
    %93 = vector.extract_strided_slice %80 {offsets = [0, 1], sizes = [8, 1], strides = [1, 1]} : vector<8x5xf32> to vector<8x1xf32>
    %94 = arith.addf %89, %93 : vector<8x1xf32>
    %95 = arith.cmpf ogt, %6, %94 : vector<8x1xf32>
    %96 = arith.extui %95 : vector<8x1xi1> to vector<8x1xi32>
    %97 = arith.addi %92, %96 : vector<8x1xi32>
    %98 = vector.extract_strided_slice %80 {offsets = [0, 2], sizes = [8, 1], strides = [1, 1]} : vector<8x5xf32> to vector<8x1xf32>
    %99 = arith.addf %94, %98 : vector<8x1xf32>
    %100 = arith.cmpf ogt, %6, %99 : vector<8x1xf32>
    %101 = arith.extui %100 : vector<8x1xi1> to vector<8x1xi32>
    %102 = arith.addi %97, %101 : vector<8x1xi32>
    %103 = vector.extract_strided_slice %80 {offsets = [0, 3], sizes = [8, 1], strides = [1, 1]} : vector<8x5xf32> to vector<8x1xf32>
    %104 = arith.addf %99, %103 : vector<8x1xf32>
    %105 = arith.cmpf ogt, %6, %104 : vector<8x1xf32>
    %106 = arith.extui %105 : vector<8x1xi1> to vector<8x1xi32>
    %107 = arith.addi %102, %106 : vector<8x1xi32>
    %108 = tpu.iota {dimensions = array<i32: 1>} : vector<8x5xi32>
    %109 = vector.broadcast %107 : vector<8x1xi32> to vector<8x5xi32>
    %110 = arith.cmpi eq, %108, %109 : vector<8x5xi32>
    %111 = arith.extui %110 : vector<8x5xi1> to vector<8x5xi32>
    %112 = arith.sitofp %111 : vector<8x5xi32> to vector<8x5xf32>
    %113 = arith.mulf %85, %112 : vector<8x5xf32>
    %cst_42 = arith.constant dense<0.000000e+00> : vector<8xf32>
    %114 = vector.multi_reduction <add>, %113, %cst_42 [1] : vector<8x5xf32> to vector<8xf32>
    %115 = vector.shape_cast %114 : vector<8xf32> to vector<8x1xf32>
    %cst_43 = arith.constant 0.000000e+00 : f32
    %116 = vector.broadcast %cst_43 : f32 to vector<8x106xf32>
    %117 = arith.sitofp %107 : vector<8x1xi32> to vector<8x1xf32>
    %118 = tpu.concatenate %112, %80, %85, %70, %117, %115, %116 in 1 : vector<8x5xf32>, vector<8x5xf32>, vector<8x5xf32>, vector<8x5xf32>, vector<8x1xf32>, vector<8x1xf32>, vector<8x106xf32> -> vector<8x128xf32>
    %c0_44 = arith.constant 0 : index
    %c0_45 = arith.constant 0 : index
    %c0_46 = arith.constant 0 : index
    %119 = vector.load %arg12[%c0_44, %c0_45, %c0_46] : memref<1x8x128xf32, #tpu.memory_space<vmem>>, vector<1x8x128xf32>
    %120 = vector.shape_cast %119 : vector<1x8x128xf32> to vector<8x128xf32>
    %121 = vector.shape_cast %118 : vector<8x128xf32> to vector<1x8x128xf32>
    tpu.vector_store %arg12[%c0_44, %c0_45, %c0_46], %121 {strides = array<i32>} : memref<1x8x128xf32, #tpu.memory_space<vmem>>, vector<1x8x128xf32>,
    return
  }
  func.func @transform_0(%arg0: i32) -> (i32, i32, i32) {
    %c0_i32 = arith.constant 0 : i32
    %c0_i32_0 = arith.constant 0 : i32
    %c0_i32_1 = arith.constant 0 : i32
    return %arg0, %c0_i32, %c0_i32_0 : i32, i32, i32
  }
  func.func @transform_1(%arg0: i32) -> (i32, i32, i32) {
    %c0_i32 = arith.constant 0 : i32
    %c0_i32_0 = arith.constant 0 : i32
    %c0_i32_1 = arith.constant 0 : i32
    return %arg0, %c0_i32, %c0_i32_0 : i32, i32, i32
  }
  func.func @transform_2(%arg0: i32) -> (i32, i32) {
    %c0_i32 = arith.constant 0 : i32
    %c0_i32_0 = arith.constant 0 : i32
    %c0_i32_1 = arith.constant 0 : i32
    return %c0_i32, %c0_i32_0 : i32, i32
  }
  func.func @transform_3(%arg0: i32) -> (i32, i32) {
    %c0_i32 = arith.constant 0 : i32
    %c0_i32_0 = arith.constant 0 : i32
    %c0_i32_1 = arith.constant 0 : i32
    return %c0_i32, %c0_i32_0 : i32, i32
  }
  func.func @transform_4(%arg0: i32) -> (i32, i32) {
    %c0_i32 = arith.constant 0 : i32
    %c0_i32_0 = arith.constant 0 : i32
    %c0_i32_1 = arith.constant 0 : i32
    return %c0_i32, %c0_i32_0 : i32, i32
  }
  func.func @transform_5(%arg0: i32) -> (i32, i32) {
    %c0_i32 = arith.constant 0 : i32
    %c0_i32_0 = arith.constant 0 : i32
    %c0_i32_1 = arith.constant 0 : i32
    return %c0_i32, %c0_i32_0 : i32, i32
  }
  func.func @transform_6(%arg0: i32) -> (i32, i32) {
    %c0_i32 = arith.constant 0 : i32
    %c0_i32_0 = arith.constant 0 : i32
    %c0_i32_1 = arith.constant 0 : i32
    return %c0_i32, %c0_i32_0 : i32, i32
  }
  func.func @transform_7(%arg0: i32) -> (i32, i32) {
    %c0_i32 = arith.constant 0 : i32
    %c0_i32_0 = arith.constant 0 : i32
    %c0_i32_1 = arith.constant 0 : i32
    return %c0_i32, %c0_i32_0 : i32, i32
  }
  func.func @transform_8(%arg0: i32) -> (i32, i32) {
    %c0_i32 = arith.constant 0 : i32
    %c0_i32_0 = arith.constant 0 : i32
    %c0_i32_1 = arith.constant 0 : i32
    return %c0_i32, %c0_i32_0 : i32, i32
  }
  func.func @transform_9(%arg0: i32) -> (i32, i32) {
    %c0_i32 = arith.constant 0 : i32
    %c0_i32_0 = arith.constant 0 : i32
    %c0_i32_1 = arith.constant 0 : i32
    return %c0_i32, %c0_i32_0 : i32, i32
  }
  func.func @transform_10(%arg0: i32) -> (i32, i32) {
    %c0_i32 = arith.constant 0 : i32
    %c0_i32_0 = arith.constant 0 : i32
    %c0_i32_1 = arith.constant 0 : i32
    return %c0_i32, %c0_i32_0 : i32, i32
  }
  func.func @transform_11(%arg0: i32) -> (i32, i32, i32) {
    %c0_i32 = arith.constant 0 : i32
    %c0_i32_0 = arith.constant 0 : i32
    %c0_i32_1 = arith.constant 0 : i32
    return %arg0, %c0_i32, %c0_i32_0 : i32, i32, i32
  }
  func.func @transform_12(%arg0: i32) -> (i32, i32) {
    %c0_i32 = arith.constant 0 : i32
    %c0_i32_0 = arith.constant 0 : i32
    %c0_i32_1 = arith.constant 0 : i32
    return %c0_i32, %c0_i32_0 : i32, i32
  }
}

</mosaic_0001>

<llo_original>
// kernel: gru_discrete_policy_forward_seq.1
$region0: #{gru_discrete_policy_forward_seq.1}
  #allocation0 [shape = 'u32[]', space=smem, size = 0x4, offset = 0x4, fixed_abs, tag = 'smem constant byte address 0x4 - core index']
  #allocation1 [shape = 'u32[144,128]{1,0:T(1,128)}', space=vmem, size = 0x12000, scoped, tag = 'internal scratch']
  %s0 = inlined_call_operand.hbm [shape: f32[8,8,20], index: 0, kind: input, shape index: {}]
  %s1 = inlined_call_operand.vmem [shape: f32[8,8,1], index: 1, kind: input, shape index: {}]
  %s2 = inlined_call_operand.vmem [shape: f32[8,32], index: 2, kind: input, shape index: {}]
  %s3 = inlined_call_operand.hbm [shape: f32[20,32], index: 3, kind: input, shape index: {}]
  %s4 = inlined_call_operand.vmem [shape: f32[1,32], index: 4, kind: input, shape index: {}]
  %s5 = inlined_call_operand.hbm [shape: f32[32,32], index: 5, kind: input, shape index: {}]
  %s6 = inlined_call_operand.vmem [shape: f32[1,32], index: 6, kind: input, shape index: {}]
  %s7 = inlined_call_operand.vmem [shape: f32[64,192], index: 7, kind: input, shape index: {}]
  %s8 = inlined_call_operand.vmem [shape: f32[1,192], index: 8, kind: input, shape index: {}]
  %s9 = inlined_call_operand.vmem [shape: f32[32,5], index: 9, kind: input, shape index: {}]
  %s10 = inlined_call_operand.vmem [shape: f32[1,5], index: 10, kind: input, shape index: {}]
  %s11 = inlined_call_operand.vmem [shape: f32[8,8,128], index: 11, kind: output, shape index: {0}]
  %s12 = inlined_call_operand.hbm [shape: f32[8,32], index: 12, kind: output, shape index: {1}]
  %13 = xla_tuple %s11, %s12
  %s14 = sld [smem:[#allocation0]]
  $region101: #{gru_discrete_policy_forward_seq.1} parent=0
    _
  %s16 = ssub.s32 1, %s14
  %s17 = scalar_select 0, %s16, %s14
  $region1: #{gru_discrete_policy_forward_seq.1} parent=0
    #allocation2 [shape = 'u8[8192]{0}', space=vmem, size = 0x2000, scoped, tag = 'input window, operand 0']
    #allocation3 [shape = 's32[2]{0}', space=sflag, size = 0x8, scoped, tag = 'scoped memory for gru_discrete_policy_forward_seq.1']
    #allocation4 [shape = 's32[2]{0}', space=sflag, size = 0x8, scoped, tag = 'scoped memory for gru_discrete_policy_forward_seq.1']
    #allocation5 [shape = 'u8[12288]{0}', space=vmem, size = 0x3000, scoped, tag = 'input window, operand 3, single buffered']
    #allocation6 [shape = 's32[1]{0}', space=sflag, size = 0x4, scoped, tag = 'scoped memory for gru_discrete_policy_forward_seq.1']
    #allocation7 [shape = 'u8[16384]{0}', space=vmem, size = 0x4000, scoped, tag = 'input window, operand 5, single buffered']
    #allocation8 [shape = 'u8[4096]{0}', space=vmem, size = 0x1000, scoped, tag = 'output window, operand 1, single buffered']
    %18 = vsyncpa [#allocation3], 0
    %s19 = scalar_lea.sflag [#allocation3], 1
    %20 = vsyncpa %s19, 0
    %21 = vsyncpa [#allocation6], 0
    %22 = vsyncpa [#allocation4], 0
    loop: start=0, step=1, limit=10
    $region2: #{gru_discrete_policy_forward_seq.1} parent=1 // loop_pre_header
      _
    $region3: #{gru_discrete_policy_forward_seq.1} parent=1 // loop_header
      %s24 = sphi 0, %s28
      %p25 = scmp.ge.s32.totalorder %s24, 10
      %s34 = sphi 0, %s36
      %s37 = sphi 0, %s34
      %s38 = sphi 0, %s37
      %s54 = sphi 0, %s38
      %s60 = sphi 0, %s62
      %s63 = sphi 0, %s60
      %s64 = sphi 0, %s63
      %s80 = sphi 0, %s64
      %s84 = sphi 0, %s84
      %s86 = sphi 0, %s84
      %s87 = sphi 0, %s86
      %s101 = sphi 0, %s87
      %s105 = sphi 0, %s105
      %s107 = sphi 0, %s105
      %s108 = sphi 0, %s107
      %s122 = sphi 0, %s108
      %s126 = sphi 0, %s126
      %s128 = sphi 0, %s126
      %s129 = sphi 0, %s128
      %s143 = sphi 0, %s129
      %s147 = sphi 0, %s147
      %s149 = sphi 0, %s147
      %s150 = sphi 0, %s149
      %s164 = sphi 0, %s150
      %s168 = sphi 0, %s168
      %s170 = sphi 0, %s168
      %s171 = sphi 0, %s170
      %s185 = sphi 0, %s171
      %s189 = sphi 0, %s189
      %s191 = sphi 0, %s189
      %s192 = sphi 0, %s191
      %s206 = sphi 0, %s192
      %s210 = sphi 0, %s210
      %s212 = sphi 0, %s210
      %s213 = sphi 0, %s212
      %s227 = sphi 0, %s213
      %s231 = sphi 0, %s231
      %s233 = sphi 0, %s231
      %s234 = sphi 0, %s233
      %s248 = sphi 0, %s234
      %s252 = sphi 0, %s252
      %s254 = sphi 0, %s252
      %s255 = sphi 0, %s254
      %s269 = sphi 0, %s255
      %s275 = sphi 0, %s277
      %s278 = sphi 0, %s275
      %s279 = sphi 0, %s278
      %s295 = sphi 0, %s279
      %s299 = sphi 0, %s299
      %s301 = sphi 0, %s299
      %s302 = sphi 0, %s301
      %s316 = sphi 0, %s302
    $region4: #{gru_discrete_policy_forward_seq.1} parent=1 // loop_header_branch
      %27 = sbr.rel (%p25) target = $region8
    $region5: #{gru_discrete_policy_forward_seq.1} parent=1 // loop_body
      %s29 = ssub.s32 %s24, 1
      %s30 = ssub.s32 %s24, 2
      %s31 = sadd.s32 %s24, 1
      %s32 = ssub.s32 %s24, %s31
      %p33 = scmp.eq.s32.totalorder %s32, 0
      %s35 = sadd.s32 %s34, 1
      %s36 = scalar_select %p33, %s34, %s35
      %p39 = pneg %p33
      %p40 = scmp.eq.s32.totalorder %s24, 7
      %p41 = por %p39, %p40
      %p42 = scmp.ne.s32.totalorder %s34, %s37
      %p43 = scmp.eq.s32.totalorder %s24, 0
      %p44 = por %p42, %p43
      %p45 = scmp.ne.s32.totalorder %s34, %s37
      %p46 = scmp.eq.s32.totalorder %s29, 7
      %p47 = por %p45, %p46
      %p48 = scmp.ne.s32.totalorder %s37, %s38
      %p49 = scmp.eq.s32.totalorder %s29, 0
      %p50 = por %p48, %p49
      %p51 = scmp.ne.s32.totalorder %s37, %s38
      %p52 = scmp.eq.s32.totalorder %s30, 7
      %p53 = por %p51, %p52
      %p55 = scmp.ne.s32.totalorder %s38, %s54
      %p56 = scmp.eq.s32.totalorder %s30, 0
      %p57 = por %p55, %p56
      %s58 = ssub.s32 %s24, %s31
      %p59 = scmp.eq.s32.totalorder %s58, 0
      %s61 = sadd.s32 %s60, 1
      %s62 = scalar_select %p59, %s60, %s61
      %p65 = pneg %p59
      %p66 = scmp.eq.s32.totalorder %s24, 7
      %p67 = por %p65, %p66
      %p68 = scmp.ne.s32.totalorder %s60, %s63
      %p69 = scmp.eq.s32.totalorder %s24, 0
      %p70 = por %p68, %p69
      %p71 = scmp.ne.s32.totalorder %s60, %s63
      %p72 = scmp.eq.s32.totalorder %s29, 7
      %p73 = por %p71, %p72
      %p74 = scmp.ne.s32.totalorder %s63, %s64
      %p75 = scmp.eq.s32.totalorder %s29, 0
      %p76 = por %p74, %p75
      %p77 = scmp.ne.s32.totalorder %s63, %s64
      %p78 = scmp.eq.s32.totalorder %s30, 7
      %p79 = por %p77, %p78
      %p81 = scmp.ne.s32.totalorder %s64, %s80
      %p82 = scmp.eq.s32.totalorder %s30, 0
      %p83 = por %p81, %p82
      %s85 = sadd.s32 %s84, 1
      %p88 = scmp.eq.s32.totalorder %s24, 7
      %p89 = scmp.ne.s32.totalorder %s84, %s86
      %p90 = scmp.eq.s32.totalorder %s24, 0
      %p91 = por %p89, %p90
      %p92 = scmp.ne.s32.totalorder %s84, %s86
      %p93 = scmp.eq.s32.totalorder %s29, 7
      %p94 = por %p92, %p93
      %p95 = scmp.ne.s32.totalorder %s86, %s87
      %p96 = scmp.eq.s32.totalorder %s29, 0
      %p97 = por %p95, %p96
      %p98 = scmp.ne.s32.totalorder %s86, %s87
      %p99 = scmp.eq.s32.totalorder %s30, 7
      %p100 = por %p98, %p99
      %p102 = scmp.ne.s32.totalorder %s87, %s101
      %p103 = scmp.eq.s32.totalorder %s30, 0
      %p104 = por %p102, %p103
      %s106 = sadd.s32 %s105, 1
      %p109 = scmp.eq.s32.totalorder %s24, 7
      %p110 = scmp.ne.s32.totalorder %s105, %s107
      %p111 = scmp.eq.s32.totalorder %s24, 0
      %p112 = por %p110, %p111
      %p113 = scmp.ne.s32.totalorder %s105, %s107
      %p114 = scmp.eq.s32.totalorder %s29, 7
      %p115 = por %p113, %p114
      %p116 = scmp.ne.s32.totalorder %s107, %s108
      %p117 = scmp.eq.s32.totalorder %s29, 0
      %p118 = por %p116, %p117
      %p119 = scmp.ne.s32.totalorder %s107, %s108
      %p120 = scmp.eq.s32.totalorder %s30, 7
      %p121 = por %p119, %p120
      %p123 = scmp.ne.s32.totalorder %s108, %s122
      %p124 = scmp.eq.s32.totalorder %s30, 0
      %p125 = por %p123, %p124
      %s127 = sadd.s32 %s126, 1
      %p130 = scmp.eq.s32.totalorder %s24, 7
      %p131 = scmp.ne.s32.totalorder %s126, %s128
      %p132 = scmp.eq.s32.totalorder %s24, 0
      %p133 = por %p131, %p132
      %p134 = scmp.ne.s32.totalorder %s126, %s128
      %p135 = scmp.eq.s32.totalorder %s29, 7
      %p136 = por %p134, %p135
      %p137 = scmp.ne.s32.totalorder %s128, %s129
      %p138 = scmp.eq.s32.totalorder %s29, 0
      %p139 = por %p137, %p138
      %p140 = scmp.ne.s32.totalorder %s128, %s129
      %p141 = scmp.eq.s32.totalorder %s30, 7
      %p142 = por %p140, %p141
      %p144 = scmp.ne.s32.totalorder %s129, %s143
      %p145 = scmp.eq.s32.totalorder %s30, 0
      %p146 = por %p144, %p145
      %s148 = sadd.s32 %s147, 1
      %p151 = scmp.eq.s32.totalorder %s24, 7
      %p152 = scmp.ne.s32.totalorder %s147, %s149
      %p153 = scmp.eq.s32.totalorder %s24, 0
      %p154 = por %p152, %p153
      %p155 = scmp.ne.s32.totalorder %s147, %s149
      %p156 = scmp.eq.s32.totalorder %s29, 7
      %p157 = por %p155, %p156
      %p158 = scmp.ne.s32.totalorder %s149, %s150
      %p159 = scmp.eq.s32.totalorder %s29, 0
      %p160 = por %p158, %p159
      %p161 = scmp.ne.s32.totalorder %s149, %s150
      %p162 = scmp.eq.s32.totalorder %s30, 7
      %p163 = por %p161, %p162
      %p165 = scmp.ne.s32.totalorder %s150, %s164
      %p166 = scmp.eq.s32.totalorder %s30, 0
      %p167 = por %p165, %p166
      %s169 = sadd.s32 %s168, 1
      %p172 = scmp.eq.s32.totalorder %s24, 7
      %p173 = scmp.ne.s32.totalorder %s168, %s170
      %p174 = scmp.eq.s32.totalorder %s24, 0
      %p175 = por %p173, %p174
      %p176 = scmp.ne.s32.totalorder %s168, %s170
      %p177 = scmp.eq.s32.totalorder %s29, 7
      %p178 = por %p176, %p177
      %p179 = scmp.ne.s32.totalorder %s170, %s171
      %p180 = scmp.eq.s32.totalorder %s29, 0
      %p181 = por %p179, %p180
      %p182 = scmp.ne.s32.totalorder %s170, %s171
      %p183 = scmp.eq.s32.totalorder %s30, 7
      %p184 = por %p182, %p183
      %p186 = scmp.ne.s32.totalorder %s171, %s185
      %p187 = scmp.eq.s32.totalorder %s30, 0
      %p188 = por %p186, %p187
      %s190 = sadd.s32 %s189, 1
      %p193 = scmp.eq.s32.totalorder %s24, 7
      %p194 = scmp.ne.s32.totalorder %s189, %s191
      %p195 = scmp.eq.s32.totalorder %s24, 0
      %p196 = por %p194, %p195
      %p197 = scmp.ne.s32.totalorder %s189, %s191
      %p198 = scmp.eq.s32.totalorder %s29, 7
      %p199 = por %p197, %p198
      %p200 = scmp.ne.s32.totalorder %s191, %s192
      %p201 = scmp.eq.s32.totalorder %s29, 0
      %p202 = por %p200, %p201
      %p203 = scmp.ne.s32.totalorder %s191, %s192
      %p204 = scmp.eq.s32.totalorder %s30, 7
      %p205 = por %p203, %p204
      %p207 = scmp.ne.s32.totalorder %s192, %s206
      %p208 = scmp.eq.s32.totalorder %s30, 0
      %p209 = por %p207, %p208
      %s211 = sadd.s32 %s210, 1
      %p214 = scmp.eq.s32.totalorder %s24, 7
      %p215 = scmp.ne.s32.totalorder %s210, %s212
      %p216 = scmp.eq.s32.totalorder %s24, 0
      %p217 = por %p215, %p216
      %p218 = scmp.ne.s32.totalorder %s210, %s212
      %p219 = scmp.eq.s32.totalorder %s29, 7
      %p220 = por %p218, %p219
      %p221 = scmp.ne.s32.totalorder %s212, %s213
      %p222 = scmp.eq.s32.totalorder %s29, 0
      %p223 = por %p221, %p222
      %p224 = scmp.ne.s32.totalorder %s212, %s213
      %p225 = scmp.eq.s32.totalorder %s30, 7
      %p226 = por %p224, %p225
      %p228 = scmp.ne.s32.totalorder %s213, %s227
      %p229 = scmp.eq.s32.totalorder %s30, 0
      %p230 = por %p228, %p229
      %s232 = sadd.s32 %s231, 1
      %p235 = scmp.eq.s32.totalorder %s24, 7
      %p236 = scmp.ne.s32.totalorder %s231, %s233
      %p237 = scmp.eq.s32.totalorder %s24, 0
      %p238 = por %p236, %p237
      %p239 = scmp.ne.s32.totalorder %s231, %s233
      %p240 = scmp.eq.s32.totalorder %s29, 7
      %p241 = por %p239, %p240
      %p242 = scmp.ne.s32.totalorder %s233, %s234
      %p243 = scmp.eq.s32.totalorder %s29, 0
      %p244 = por %p242, %p243
      %p245 = scmp.ne.s32.totalorder %s233, %s234
      %p246 = scmp.eq.s32.totalorder %s30, 7
      %p247 = por %p245, %p246
      %p249 = scmp.ne.s32.totalorder %s234, %s248
      %p250 = scmp.eq.s32.totalorder %s30, 0
      %p251 = por %p249, %p250
      %s253 = sadd.s32 %s252, 1
      %p256 = scmp.eq.s32.totalorder %s24, 7
      %p257 = scmp.ne.s32.totalorder %s252, %s254
      %p258 = scmp.eq.s32.totalorder %s24, 0
      %p259 = por %p257, %p258
      %p260 = scmp.ne.s32.totalorder %s252, %s254
      %p261 = scmp.eq.s32.totalorder %s29, 7
      %p262 = por %p260, %p261
      %p263 = scmp.ne.s32.totalorder %s254, %s255
      %p264 = scmp.eq.s32.totalorder %s29, 0
      %p265 = por %p263, %p264
      %p266 = scmp.ne.s32.totalorder %s254, %s255
      %p267 = scmp.eq.s32.totalorder %s30, 7
      %p268 = por %p266, %p267
      %p270 = scmp.ne.s32.totalorder %s255, %s269
      %p271 = scmp.eq.s32.totalorder %s30, 0
      %p272 = por %p270, %p271
      %s273 = ssub.s32 %s24, %s31
      %p274 = scmp.eq.s32.totalorder %s273, 0
      %s276 = sadd.s32 %s275, 1
      %s277 = scalar_select %p274, %s275, %s276
      %p280 = pneg %p274
      %p281 = scmp.eq.s32.totalorder %s24, 7
      %p282 = por %p280, %p281
      %p283 = scmp.ne.s32.totalorder %s275, %s278
      %p284 = scmp.eq.s32.totalorder %s24, 0
      %p285 = por %p283, %p284
      %p286 = scmp.ne.s32.totalorder %s275, %s278
      %p287 = scmp.eq.s32.totalorder %s29, 7
      %p288 = por %p286, %p287
      %p289 = scmp.ne.s32.totalorder %s278, %s279
      %p290 = scmp.eq.s32.totalorder %s29, 0
      %p291 = por %p289, %p290
      %p292 = scmp.ne.s32.totalorder %s278, %s279
      %p293 = scmp.eq.s32.totalorder %s30, 7
      %p294 = por %p292, %p293
      %p296 = scmp.ne.s32.totalorder %s279, %s295
      %p297 = scmp.eq.s32.totalorder %s30, 0
      %p298 = por %p296, %p297
      %s300 = sadd.s32 %s299, 1
      %p303 = scmp.eq.s32.totalorder %s24, 7
      %p304 = scmp.ne.s32.totalorder %s299, %s301
      %p305 = scmp.eq.s32.totalorder %s24, 0
      %p306 = por %p304, %p305
      %p307 = scmp.ne.s32.totalorder %s299, %s301
      %p308 = scmp.eq.s32.totalorder %s29, 7
      %p309 = por %p307, %p308
      %p310 = scmp.ne.s32.totalorder %s301, %s302
      %p311 = scmp.eq.s32.totalorder %s29, 0
      %p312 = por %p310, %p311
      %p313 = scmp.ne.s32.totalorder %s301, %s302
      %p314 = scmp.eq.s32.totalorder %s30, 7
      %p315 = por %p313, %p314
      %p317 = scmp.ne.s32.totalorder %s302, %s316
      %p318 = scmp.eq.s32.totalorder %s30, 0
      %p319 = por %p317, %p318
      %p320 = scmp.le.s32.totalorder 1, %s24
      %p321 = scmp.lt.s32.totalorder %s24, 9
      %p322 = pnand %p320, %p321
      %p323 = pneg %p322
      // Predicated region
      $region9: #{gru_discrete_policy_forward_seq.1} parent=5 // pred_check
        _
      $region10: #{gru_discrete_policy_forward_seq.1} parent=5 // pred_check_branch
        %325 = sbr.rel (%p322) target = $region12
      $region11: #{gru_discrete_policy_forward_seq.1} parent=5 // pred_region
        %s326 = ssub.s32 %s24, 1
        // Predicated region
        $region13: #{gru_discrete_policy_forward_seq.1} parent=11 // pred_check
          %p327 = pneg %p97
        $region14: #{gru_discrete_policy_forward_seq.1} parent=11 // pred_check_branch
          %329 = sbr.rel (%p327) target = $region16
        $region15: #{gru_discrete_policy_forward_seq.1} parent=11 // pred_region
          _
        $region16: #{gru_discrete_policy_forward_seq.1} parent=11 // pred_fallthru
          _
        // Predicated region
        $region17: #{gru_discrete_policy_forward_seq.1} parent=11 // pred_check
          %p330 = pneg %p118
        $region18: #{gru_discrete_policy_forward_seq.1} parent=11 // pred_check_branch
          %332 = sbr.rel (%p330) target = $region20
        $region19: #{gru_discrete_policy_forward_seq.1} parent=11 // pred_region
          %s334 = ssub.s32 384, 384
          %335 = vsyncadd [#allocation6], %s334
          %s336 = sshll.u32 [#allocation5], 4
          %s337 = int_to_ptr.vmem [resolvable:$true] %s336
          %342 = dma.hbm_to_vmem [thread:$0]  %s3, 384, %s337, [#allocation6], 128, 128, 8
        $region20: #{gru_discrete_policy_forward_seq.1} parent=11 // pred_fallthru
          _
        // Predicated region
        $region21: #{gru_discrete_policy_forward_seq.1} parent=11 // pred_check
          %p343 = pneg %p139
        $region22: #{gru_discrete_policy_forward_seq.1} parent=11 // pred_check_branch
          %345 = sbr.rel (%p343) target = $region24
        $region23: #{gru_discrete_policy_forward_seq.1} parent=11 // pred_region
          _
        $region24: #{gru_discrete_policy_forward_seq.1} parent=11 // pred_fallthru
          _
        // Predicated region
        $region25: #{gru_discrete_policy_forward_seq.1} parent=11 // pred_check
          %p346 = pneg %p160
        $region26: #{gru_discrete_policy_forward_seq.1} parent=11 // pred_check_branch
          %348 = sbr.rel (%p346) target = $region28
        $region27: #{gru_discrete_policy_forward_seq.1} parent=11 // pred_region
          %s350 = ssub.s32 512, 512
          %351 = vsyncadd [#allocation6], %s350
          %s352 = sshll.u32 [#allocation7], 4
          %s353 = int_to_ptr.vmem [resolvable:$true] %s352
          %358 = dma.hbm_to_vmem [thread:$0]  %s5, 512, %s353, [#allocation6], 128, 128, 8
        $region28: #{gru_discrete_policy_forward_seq.1} parent=11 // pred_fallthru
          _
        // Predicated region
        $region29: #{gru_discrete_policy_forward_seq.1} parent=11 // pred_check
          %p359 = pneg %p181
        $region30: #{gru_discrete_policy_forward_seq.1} parent=11 // pred_check_branch
          %361 = sbr.rel (%p359) target = $region32
        $region31: #{gru_discrete_policy_forward_seq.1} parent=11 // pred_region
          _
        $region32: #{gru_discrete_policy_forward_seq.1} parent=11 // pred_fallthru
          _
        // Predicated region
        $region33: #{gru_discrete_policy_forward_seq.1} parent=11 // pred_check
          %p362 = pneg %p202
        $region34: #{gru_discrete_policy_forward_seq.1} parent=11 // pred_check_branch
          %364 = sbr.rel (%p362) target = $region36
        $region35: #{gru_discrete_policy_forward_seq.1} parent=11 // pred_region
          _
        $region36: #{gru_discrete_policy_forward_seq.1} parent=11 // pred_fallthru
          _
        // Predicated region
        $region37: #{gru_discrete_policy_forward_seq.1} parent=11 // pred_check
          %p365 = pneg %p223
        $region38: #{gru_discrete_policy_forward_seq.1} parent=11 // pred_check_branch
          %367 = sbr.rel (%p365) target = $region40
        $region39: #{gru_discrete_policy_forward_seq.1} parent=11 // pred_region
          _
        $region40: #{gru_discrete_policy_forward_seq.1} parent=11 // pred_fallthru
          _
        // Predicated region
        $region41: #{gru_discrete_policy_forward_seq.1} parent=11 // pred_check
          %p368 = pneg %p244
        $region42: #{gru_discrete_policy_forward_seq.1} parent=11 // pred_check_branch
          %370 = sbr.rel (%p368) target = $region44
        $region43: #{gru_discrete_policy_forward_seq.1} parent=11 // pred_region
          _
        $region44: #{gru_discrete_policy_forward_seq.1} parent=11 // pred_fallthru
          _
        // Predicated region
        $region45: #{gru_discrete_policy_forward_seq.1} parent=11 // pred_check
          %p371 = pneg %p265
        $region46: #{gru_discrete_policy_forward_seq.1} parent=11 // pred_check_branch
          %373 = sbr.rel (%p371) target = $region48
        $region47: #{gru_discrete_policy_forward_seq.1} parent=11 // pred_region
          _
        $region48: #{gru_discrete_policy_forward_seq.1} parent=11 // pred_fallthru
          _
      $region12: #{gru_discrete_policy_forward_seq.1} parent=5 // pred_fallthru
        _
      %p374 = scmp.lt.s32.totalorder %s24, 8
      // Predicated region
      $region49: #{gru_discrete_policy_forward_seq.1} parent=5 // pred_check
        %p375 = pneg %p374
      $region50: #{gru_discrete_policy_forward_seq.1} parent=5 // pred_check_branch
        %377 = sbr.rel (%p375) target = $region52
      $region51: #{gru_discrete_policy_forward_seq.1} parent=5 // pred_region
        // Predicated region
        $region53: #{gru_discrete_policy_forward_seq.1} parent=51 // pred_check
          %p378 = pneg %p44
        $region54: #{gru_discrete_policy_forward_seq.1} parent=51 // pred_check_branch
          %380 = sbr.rel (%p378) target = $region56
        $region55: #{gru_discrete_policy_forward_seq.1} parent=51 // pred_region
          %s381 = sand.u32 %s34, 1
          %s382 = scalar_lea.sflag [#allocation3], %s381
          %s383 = sand.u32 %s34, 1
          %s384 = smul.addr %s383, 8
          %s385 = scalar_lea.vmem [#allocation2], %s384
          %s387 = ssub.s32 128, 128
          %388 = vsyncadd %s382, %s387
          %s389 = smul.addr %s24, 128
          %s390 = scalar_lea.hbm %s0, %s389
          %s392 = sshll.u32 %s385, 4
          %s393 = int_to_ptr.vmem [resolvable:$true] %s392
          %395 = dma.hbm_to_vmem [thread:$0]  %s390, 128, %s393, %s382
        $region56: #{gru_discrete_policy_forward_seq.1} parent=51 // pred_fallthru
          _
        // Predicated region
        $region57: #{gru_discrete_policy_forward_seq.1} parent=51 // pred_check
          %p396 = pneg %p70
        $region58: #{gru_discrete_policy_forward_seq.1} parent=51 // pred_check_branch
          %398 = sbr.rel (%p396) target = $region60
        $region59: #{gru_discrete_policy_forward_seq.1} parent=51 // pred_region
          %p399 = scmp.lt.s32.totalorder %s24, 7
          %s400 = scalar_select %p399, %s24, 7
          %s401 = smul.addr %s400, 8
          %s402 = scalar_lea.vmem %s1, %s401
        $region60: #{gru_discrete_policy_forward_seq.1} parent=51 // pred_fallthru
          _
      $region52: #{gru_discrete_policy_forward_seq.1} parent=5 // pred_fallthru
        _
      %p403 = scmp.le.s32.totalorder 1, %s24
      %p404 = scmp.lt.s32.totalorder %s24, 9
      %p405 = pnand %p403, %p404
      %p406 = pneg %p405
      // Predicated region
      $region61: #{gru_discrete_policy_forward_seq.1} parent=5 // pred_check
        _
      $region62: #{gru_discrete_policy_forward_seq.1} parent=5 // pred_check_branch
        %408 = sbr.rel (%p405) target = $region64
      $region63: #{gru_discrete_policy_forward_seq.1} parent=5 // pred_region
        %s409 = ssub.s32 %s24, 1
        %s410 = sand.u32 %s37, 1
        %s411 = scalar_lea.sflag [#allocation3], %s410
        %s412 = sand.u32 %s37, 1
        %s413 = smul.addr %s412, 8
        %s414 = scalar_lea.vmem [#allocation2], %s413
        // Predicated region
        $region65: #{gru_discrete_policy_forward_seq.1} parent=63 // pred_check
          %p415 = pneg %p50
        $region66: #{gru_discrete_policy_forward_seq.1} parent=63 // pred_check_branch
          %417 = sbr.rel (%p415) target = $region68
        $region67: #{gru_discrete_policy_forward_seq.1} parent=63 // pred_region
          %418 = dma.done %s411, 128
        $region68: #{gru_discrete_policy_forward_seq.1} parent=63 // pred_fallthru
          _
        // Predicated region
        $region69: #{gru_discrete_policy_forward_seq.1} parent=63 // pred_check
          %p419 = pneg %p118
        $region70: #{gru_discrete_policy_forward_seq.1} parent=63 // pred_check_branch
          %421 = sbr.rel (%p419) target = $region72
        $region71: #{gru_discrete_policy_forward_seq.1} parent=63 // pred_region
          %422 = dma.done [#allocation6], 384
        $region72: #{gru_discrete_policy_forward_seq.1} parent=63 // pred_fallthru
          _
        // Predicated region
        $region73: #{gru_discrete_policy_forward_seq.1} parent=63 // pred_check
          %p423 = pneg %p160
        $region74: #{gru_discrete_policy_forward_seq.1} parent=63 // pred_check_branch
          %425 = sbr.rel (%p423) target = $region76
        $region75: #{gru_discrete_policy_forward_seq.1} parent=63 // pred_region
          %426 = dma.done [#allocation6], 512
        $region76: #{gru_discrete_policy_forward_seq.1} parent=63 // pred_fallthru
          _
        %s427 = sand.u32 %s37, 1
        %s428 = scalar_lea.sflag [#allocation3], %s427
        %s429 = sand.u32 %s37, 1
        %s430 = smul.addr %s429, 8
        %s431 = scalar_lea.vmem [#allocation2], %s430
        %p432 = pneg %p50
        %p433 = pneg %p47
        %p434 = scmp.lt.s32.totalorder %s29, 7
        %s435 = scalar_select %p434, %s29, 7
        %s436 = smul.addr %s435, 8
        %s437 = scalar_lea.vmem %s1, %s436
        %p438 = pneg %p76
        %p439 = pneg %p73
        %p440 = pneg %p97
        %p441 = pneg %p94
        %p442 = pneg %p118
        %p443 = pneg %p115
        %p444 = pneg %p139
        %p445 = pneg %p136
        %p446 = pneg %p160
        %p447 = pneg %p157
        %p448 = pneg %p181
        %p449 = pneg %p178
        %p450 = pneg %p202
        %p451 = pneg %p199
        %p452 = pneg %p223
        %p453 = pneg %p220
        %p454 = pneg %p244
        %p455 = pneg %p241
        %p456 = pneg %p265
        %p457 = pneg %p262
        %p458 = pneg %p291
        %p459 = pneg %p288
        %p460 = scmp.lt.s32.totalorder %s29, 7
        %s461 = scalar_select %p460, %s29, 7
        %s462 = smul.addr %s461, 8
        %s463 = scalar_lea.vmem %s11, %s462
        %p464 = pneg %p312
        %p465 = pneg %p309
        %p466 = scmp.lt.s32.totalorder %s29, 7
        %s467 = scalar_select %p466, %s29, 7
        %s468 = smul.addr %s467, 8
        %s469 = scalar_lea.vmem %s1, %s468
        %p470 = scmp.lt.s32.totalorder %s29, 7
        %s471 = scalar_select %p470, %s29, 7
        %s472 = smul.addr %s471, 8
        %s473 = scalar_lea.vmem %s11, %s472
        %p474 = scmp.eq.s32.totalorder %s29, 0
        // Predicated region
        $region77: #{gru_discrete_policy_forward_seq.1} parent=63 // pred_check
          %p475 = pneg %p474
        $region78: #{gru_discrete_policy_forward_seq.1} parent=63 // pred_check_branch
          %477 = sbr.rel (%p475) target = $region80
        $region79: #{gru_discrete_policy_forward_seq.1} parent=63 // pred_region
          %v478 = vld [vmem:[%s2] sm:$0xff]
          %vm479 = vcmask 261120
          %480 = vst.msk [vmem:[#allocation8] sm:$0xff] %vm479, %v478
        $region80: #{gru_discrete_policy_forward_seq.1} parent=63 // pred_fallthru
          _
        %v481 = vld [vmem:[%s414] sm:$0xff]
        %v482 = vld [vmem:[%s469] sm:$0xff]
        %v483 = vld [vmem:[#allocation8] sm:$0xff]
        %v484 = vld [vmem:[#allocation5] sm:$0xff]
        %v485 = vld [vmem:[#allocation5 + $0x8] sm:$0xff]
        %v486 = vld [vmem:[#allocation5 + $0x10] sm:$0xf]
        %v487 = vld [vmem:[%s4] sm:$0x1]
        %v489 = vlaneseq
        %v490 = vshrl.u32 %v489, 7
        %v491 = vsub.s32 0, %v490
        %v492 = vrot.slane %v487, %v491
        %vm494 = vcmask 162816
        %v496 = vsel %vm494, %v481, 0
        %vm498 = vcmask 1043456
        %v500 = vsel %vm498, %v486, 0
        %502 = vmatprep.subr.mxu0 0.0
        %503 = vmatpush1.msra.mxu0 %v484
        %504 = vmatprep.subr.mxu0 0.0
        %505 = vmatpush1.msra.mxu0 %v485
        %506 = vmatprep.subr.mxu0 0.0
        %507 = vmatpush1.msra.mxu0 %v500
        %508 = vmatprep.subr.mxu0 0.0
        %509 = vmatpush1.msra.mxu0 0.0
        %510 = vmatprep.subr.mxu0 0.0
        %511 = vmatpush1.msra.mxu0 0.0
        %512 = vmatprep.subr.mxu0 0.0
        %513 = vmatpush1.msra.mxu0 0.0
        %514 = vmatprep.subr.mxu0 0.0
        %515 = vmatpush1.msra.mxu0 0.0
        %516 = vmatprep.subr.mxu0 0.0
        %517 = vmatpush1.msra.mxu0 0.0
        %518 = vmatprep.subr.mxu0 0.0
        %519 = vmatpush1.msra.mxu0 0.0
        %520 = vmatprep.subr.mxu0 0.0
        %521 = vmatpush1.msra.mxu0 0.0
        %522 = vmatprep.subr.mxu0 0.0
        %523 = vmatpush1.msra.mxu0 0.0
        %524 = vmatprep.subr.mxu0 0.0
        %525 = vmatpush1.msra.mxu0 0.0
        %526 = vmatprep.subr.mxu0 0.0
        %527 = vmatpush1.msra.mxu0 0.0
        %528 = vmatprep.subr.mxu0 0.0
        %529 = vmatpush1.msra.mxu0 0.0
        %530 = vmatprep.subr.mxu0 0.0
        %531 = vmatpush1.msra.mxu0 0.0
        %532 = vmatprep.subr.mxu0 0.0
        %533 = vmatpush1.msra.mxu0 0.0
        %534 = vmatprep.subr.mxu0 0.0
        %535 = vmatpush1.msra.mxu0 0.0
        %536 = vmatprep.subr.mxu0 0.0
        %537 = vmatpush1.msra.mxu0 0.0
        %538 = vmatprep.subr.mxu0 0.0
        %539 = vmatpush1.msra.mxu0 0.0
        %540 = vmatprep.subr.mxu0 0.0
        %541 = vmatpush1.msra.mxu0 0.0
        %542 = vmatprep.subr.mxu0 0.0
        %543 = vmatpush1.msra.mxu0 0.0
        %544 = vmatprep.subr.mxu0 0.0
        %545 = vmatpush1.msra.mxu0 0.0
        %546 = vmatprep.subr.mxu0 0.0
        %547 = vmatpush1.msra.mxu0 0.0
        %548 = vmatprep.subr.mxu0 0.0
        %549 = vmatpush1.msra.mxu0 0.0
        %550 = vmatprep.subr.mxu0 0.0
        %551 = vmatpush1.msra.mxu0 0.0
        %552 = vmatprep.subr.mxu0 0.0
        %553 = vmatpush1.msra.mxu0 0.0
        %554 = vmatprep.subr.mxu0 0.0
        %555 = vmatpush1.msra.mxu0 0.0
        %556 = vmatprep.subr.mxu0 0.0
        %557 = vmatpush1.msra.mxu0 0.0
        %558 = vmatprep.subr.mxu0 0.0
        %559 = vmatpush1.msra.mxu0 0.0
        %560 = vmatprep.subr.mxu0 0.0
        %561 = vmatpush1.msra.mxu0 0.0
        %562 = vmatprep.subr.mxu0 0.0
        %563 = vmatpush1.msra.mxu0 0.0
        %564 = vmatprep.subr.mxu0 0.0
        %565 = vmatpush1.msra.mxu0 0.0
        %566 = vmatprep.mubr.f32.mxu0 0.0
        %567 = vmatmul.mubr.f32.gmra.mrb[0].mxu0 %v496
        %v568 = vpop.f32.mrb[0].mxu0
        %v569 = vadd.f32 %v492, %v568
        %v570 = vpop.f32.mrb[0].mxu0
        %571 = vdwg.mxu0
        %vm572 = vcmp.gt.f32.partialorder %v569, 0.0
        %v573 = vmul.f32 %v569, 0.01
        %v574 = vsel %vm572, %v569, %v573
        %v575 = vld [vmem:[#allocation7] sm:$0xff]
        %v576 = vld [vmem:[#allocation7 + $0x8] sm:$0xff]
        %v577 = vld [vmem:[#allocation7 + $0x10] sm:$0xff]
        %v578 = vld [vmem:[#allocation7 + $0x18] sm:$0xff]
        %v579 = vld [vmem:[%s6] sm:$0x1]
        %v581 = vlaneseq
        %v582 = vshrl.u32 %v581, 7
        %v583 = vsub.s32 0, %v582
        %v584 = vrot.slane %v579, %v583
        %vm586 = vcmask 261120
        %v588 = vsel %vm586, %v574, 0
        %590 = vmatprep.subr.mxu0 0.0
        %591 = vmatpush1.msra.mxu0 %v575
        %592 = vmatprep.subr.mxu0 0.0
        %593 = vmatpush1.msra.mxu0 %v576
        %594 = vmatprep.subr.mxu0 0.0
        %595 = vmatpush1.msra.mxu0 %v577
        %596 = vmatprep.subr.mxu0 0.0
        %597 = vmatpush1.msra.mxu0 %v578
        %598 = vmatprep.subr.mxu0 0.0
        %599 = vmatpush1.msra.mxu0 0.0
        %600 = vmatprep.subr.mxu0 0.0
        %601 = vmatpush1.msra.mxu0 0.0
        %602 = vmatprep.subr.mxu0 0.0
        %603 = vmatpush1.msra.mxu0 0.0
        %604 = vmatprep.subr.mxu0 0.0
        %605 = vmatpush1.msra.mxu0 0.0
        %606 = vmatprep.subr.mxu0 0.0
        %607 = vmatpush1.msra.mxu0 0.0
        %608 = vmatprep.subr.mxu0 0.0
        %609 = vmatpush1.msra.mxu0 0.0
        %610 = vmatprep.subr.mxu0 0.0
        %611 = vmatpush1.msra.mxu0 0.0
        %612 = vmatprep.subr.mxu0 0.0
        %613 = vmatpush1.msra.mxu0 0.0
        %614 = vmatprep.subr.mxu0 0.0
        %615 = vmatpush1.msra.mxu0 0.0
        %616 = vmatprep.subr.mxu0 0.0
        %617 = vmatpush1.msra.mxu0 0.0
        %618 = vmatprep.subr.mxu0 0.0
        %619 = vmatpush1.msra.mxu0 0.0
        %620 = vmatprep.subr.mxu0 0.0
        %621 = vmatpush1.msra.mxu0 0.0
        %622 = vmatprep.subr.mxu0 0.0
        %623 = vmatpush1.msra.mxu0 0.0
        %624 = vmatprep.subr.mxu0 0.0
        %625 = vmatpush1.msra.mxu0 0.0
        %626 = vmatprep.subr.mxu0 0.0
        %627 = vmatpush1.msra.mxu0 0.0
        %628 = vmatprep.subr.mxu0 0.0
        %629 = vmatpush1.msra.mxu0 0.0
        %630 = vmatprep.subr.mxu0 0.0
        %631 = vmatpush1.msra.mxu0 0.0
        %632 = vmatprep.subr.mxu0 0.0
        %633 = vmatpush1.msra.mxu0 0.0
        %634 = vmatprep.subr.mxu0 0.0
        %635 = vmatpush1.msra.mxu0 0.0
        %636 = vmatprep.subr.mxu0 0.0
        %637 = vmatpush1.msra.mxu0 0.0
        %638 = vmatprep.subr.mxu0 0.0
        %639 = vmatpush1.msra.mxu0 0.0
        %640 = vmatprep.subr.mxu0 0.0
        %641 = vmatpush1.msra.mxu0 0.0
        %642 = vmatprep.subr.mxu0 0.0
        %643 = vmatpush1.msra.mxu0 0.0
        %644 = vmatprep.subr.mxu0 0.0
        %645 = vmatpush1.msra.mxu0 0.0
        %646 = vmatprep.subr.mxu0 0.0
        %647 = vmatpush1.msra.mxu0 0.0
        %648 = vmatprep.subr.mxu0 0.0
        %649 = vmatpush1.msra.mxu0 0.0
        %650 = vmatprep.subr.mxu0 0.0
        %651 = vmatpush1.msra.mxu0 0.0
        %652 = vmatprep.subr.mxu0 0.0
        %653 = vmatpush1.msra.mxu0 0.0
        %654 = vmatprep.mubr.f32.mxu0 0.0
        %655 = vmatmul.mubr.f32.gmra.mrb[0].mxu0 %v588
        %v656 = vpop.f32.mrb[0].mxu0
        %v657 = vadd.f32 %v584, %v656
        %v658 = vpop.f32.mrb[0].mxu0
        %659 = vdwg.mxu0
        %vm660 = vcmp.gt.f32.partialorder %v657, 0.0
        %v661 = vmul.f32 %v657, 0.01
        %v662 = vsel %vm660, %v657, %v661
        %664 = vrot.lane.b32.xlu0 %v483, 32
        %v665 = vpop.permute.xlu0 %664
        %v667 = vsel %vm586, %v662, %v665
        %v668 = vld [vmem:[%s7] sm:$0xff]
        %v669 = vld [vmem:[%s7 + $0x8] sm:$0xff]
        %v670 = vld [vmem:[%s7 + $0x10] sm:$0xff]
        %v671 = vld [vmem:[%s7 + $0x18] sm:$0xff]
        %v672 = vld [vmem:[%s7 + $0x20] sm:$0xff]
        %v673 = vld [vmem:[%s7 + $0x28] sm:$0xff]
        %v674 = vld [vmem:[%s7 + $0x30] sm:$0xff]
        %v675 = vld [vmem:[%s7 + $0x38] sm:$0xff]
        %v676 = vld [vmem:[%s7 + $0x40] sm:$0xff]
        %v677 = vld [vmem:[%s7 + $0x48] sm:$0xff]
        %v678 = vld [vmem:[%s7 + $0x50] sm:$0xff]
        %v679 = vld [vmem:[%s7 + $0x58] sm:$0xff]
        %v680 = vld [vmem:[%s7 + $0x60] sm:$0xff]
        %v681 = vld [vmem:[%s7 + $0x68] sm:$0xff]
        %v682 = vld [vmem:[%s7 + $0x70] sm:$0xff]
        %v683 = vld [vmem:[%s7 + $0x78] sm:$0xff]
        %v684 = vld [vmem:[%s8] sm:$0x3]
        %v686 = vlaneseq
        %v687 = vshrl.u32 %v686, 7
        %v688 = vsub.s32 0, %v687
        %v689 = vrot.slane %v684, %v688
        %v690 = vlaneseq
        %v691 = vshrl.u32 %v690, 7
        %v692 = vsub.s32 1, %v691
        %v693 = vrot.slane %v684, %v692
        %vm696 = vcmask 523264
        %v698 = vsel %vm696, %v667, 0
        %700 = vmatprep.subr.mxu0 %v669
        %701 = vmatpush1.msra.mxu0 %v668
        %702 = vmatprep.subr.mxu0 %v671
        %703 = vmatpush1.msra.mxu0 %v670
        %704 = vmatprep.subr.mxu0 %v673
        %705 = vmatpush1.msra.mxu0 %v672
        %706 = vmatprep.subr.mxu0 %v675
        %707 = vmatpush1.msra.mxu0 %v674
        %708 = vmatprep.subr.mxu0 %v677
        %709 = vmatpush1.msra.mxu0 %v676
        %710 = vmatprep.subr.mxu0 %v679
        %711 = vmatpush1.msra.mxu0 %v678
        %712 = vmatprep.subr.mxu0 %v681
        %713 = vmatpush1.msra.mxu0 %v680
        %714 = vmatprep.subr.mxu0 %v683
        %715 = vmatpush1.msra.mxu0 %v682
        %716 = vmatprep.subr.mxu0 0.0
        %717 = vmatpush1.msra.mxu0 0.0
        %718 = vmatprep.subr.mxu0 0.0
        %719 = vmatpush1.msra.mxu0 0.0
        %720 = vmatprep.subr.mxu0 0.0
        %721 = vmatpush1.msra.mxu0 0.0
        %722 = vmatprep.subr.mxu0 0.0
        %723 = vmatpush1.msra.mxu0 0.0
        %724 = vmatprep.subr.mxu0 0.0
        %725 = vmatpush1.msra.mxu0 0.0
        %726 = vmatprep.subr.mxu0 0.0
        %727 = vmatpush1.msra.mxu0 0.0
        %728 = vmatprep.subr.mxu0 0.0
        %729 = vmatpush1.msra.mxu0 0.0
        %730 = vmatprep.subr.mxu0 0.0
        %731 = vmatpush1.msra.mxu0 0.0
        %732 = vmatprep.subr.mxu0 0.0
        %733 = vmatpush1.msra.mxu0 0.0
        %734 = vmatprep.subr.mxu0 0.0
        %735 = vmatpush1.msra.mxu0 0.0
        %736 = vmatprep.subr.mxu0 0.0
        %737 = vmatpush1.msra.mxu0 0.0
        %738 = vmatprep.subr.mxu0 0.0
        %739 = vmatpush1.msra.mxu0 0.0
        %740 = vmatprep.subr.mxu0 0.0
        %741 = vmatpush1.msra.mxu0 0.0
        %742 = vmatprep.subr.mxu0 0.0
        %743 = vmatpush1.msra.mxu0 0.0
        %744 = vmatprep.subr.mxu0 0.0
        %745 = vmatpush1.msra.mxu0 0.0
        %746 = vmatprep.subr.mxu0 0.0
        %747 = vmatpush1.msra.mxu0 0.0
        %748 = vmatprep.subr.mxu0 0.0
        %749 = vmatpush1.msra.mxu0 0.0
        %750 = vmatprep.subr.mxu0 0.0
        %751 = vmatpush1.msra.mxu0 0.0
        %752 = vmatprep.subr.mxu0 0.0
        %753 = vmatpush1.msra.mxu0 0.0
        %754 = vmatprep.subr.mxu0 0.0
        %755 = vmatpush1.msra.mxu0 0.0
        %756 = vmatprep.subr.mxu0 0.0
        %757 = vmatpush1.msra.mxu0 0.0
        %758 = vmatprep.subr.mxu0 0.0
        %759 = vmatpush1.msra.mxu0 0.0
        %760 = vmatprep.subr.mxu0 0.0
        %761 = vmatpush1.msra.mxu0 0.0
        %762 = vmatprep.subr.mxu0 0.0
        %763 = vmatpush1.msra.mxu0 0.0
        %764 = vmatprep.mubr.f32.mxu0 0.0
        %765 = vmatmul.mubr.f32.gmra.mrb[0].mxu0 %v698
        %v766 = vpop.f32.mrb[0].mxu0
        %v767 = vadd.f32 %v689, %v766
        %v768 = vpop.f32.mrb[0].mxu0
        %v769 = vadd.f32 %v693, %v768
        %770 = vdwg.mxu0
        %772 = vrot.lane.b32.xlu0 %v767, 32
        %v773 = vpop.permute.xlu0 %772
        %v775 = vadd.f32 %v767, %v773
        %v776 = vxor.u32 %v775, 2147483648
        %v777 = vmul.f32 %v776, 1.442695
        %v778 = vpow.pop %v777
        %v779 = vadd.f32 %v778, 1.0
        %v780 = vrcp.pop %v779
        %v781 = vmul.f32 1.0, %v780
        %783 = vrot.lane.b32.xlu0 %v769, 32
        %v784 = vpop.permute.xlu0 %783
        %v786 = vadd.f32 %v767, %v784
        %v787 = vxor.u32 %v786, 2147483648
        %v788 = vmul.f32 %v787, 1.442695
        %v789 = vpow.pop %v788
        %v790 = vadd.f32 %v789, 1.0
        %v791 = vrcp.pop %v790
        %v792 = vmul.f32 1.0, %v791
        %793 = vrot.lane.b32.xlu0 %v769, 96
        %v794 = vpop.permute.xlu0 %793
        %v796 = vmul.f32 %v781, %v794
        %798 = vrot.lane.b32.xlu0 %v796, 64
        %v799 = vpop.permute.xlu0 %798
        %v801 = vadd.f32 %v767, %v799
        %v802 = vtanh.pop %v801
        %v803 = vsub.f32 1.0, %v792
        %805 = vrot.lane.b32.xlu0 %v802, 96
        %v806 = vpop.permute.xlu0 %805
        %v808 = vmul.f32 %v803, %v806
        %v809 = vmul.f32 %v792, %v665
        %v810 = vadd.f32 %v808, %v809
        %812 = vrot.lane.b32.xlu0 %v810, 96
        %v813 = vpop.permute.xlu0 %812
        %815 = vst.msk [vmem:[#allocation8] sm:$0xff] %vm586, %v813
        %v816 = vld [vmem:[%s9] sm:$0xff]
        %v817 = vld [vmem:[%s9 + $0x8] sm:$0xff]
        %v818 = vld [vmem:[%s9 + $0x10] sm:$0xff]
        %v819 = vld [vmem:[%s9 + $0x18] sm:$0xff]
        %v820 = vld [vmem:[%s10] sm:$0x1]
        %v822 = vlaneseq
        %v823 = vshrl.u32 %v822, 7
        %v824 = vsub.s32 0, %v823
        %v825 = vrot.slane %v820, %v824
        %v827 = vsel %vm586, %v813, 0
        %829 = vmatprep.subr.mxu0 0.0
        %830 = vmatpush1.msra.mxu0 %v816
        %831 = vmatprep.subr.mxu0 0.0
        %832 = vmatpush1.msra.mxu0 %v817
        %833 = vmatprep.subr.mxu0 0.0
        %834 = vmatpush1.msra.mxu0 %v818
        %835 = vmatprep.subr.mxu0 0.0
        %836 = vmatpush1.msra.mxu0 %v819
        %837 = vmatprep.subr.mxu0 0.0
        %838 = vmatpush1.msra.mxu0 0.0
        %839 = vmatprep.subr.mxu0 0.0
        %840 = vmatpush1.msra.mxu0 0.0
        %841 = vmatprep.subr.mxu0 0.0
        %842 = vmatpush1.msra.mxu0 0.0
        %843 = vmatprep.subr.mxu0 0.0
        %844 = vmatpush1.msra.mxu0 0.0
        %845 = vmatprep.subr.mxu0 0.0
        %846 = vmatpush1.msra.mxu0 0.0
        %847 = vmatprep.subr.mxu0 0.0
        %848 = vmatpush1.msra.mxu0 0.0
        %849 = vmatprep.subr.mxu0 0.0
        %850 = vmatpush1.msra.mxu0 0.0
        %851 = vmatprep.subr.mxu0 0.0
        %852 = vmatpush1.msra.mxu0 0.0
        %853 = vmatprep.subr.mxu0 0.0
        %854 = vmatpush1.msra.mxu0 0.0
        %855 = vmatprep.subr.mxu0 0.0
        %856 = vmatpush1.msra.mxu0 0.0
        %857 = vmatprep.subr.mxu0 0.0
        %858 = vmatpush1.msra.mxu0 0.0
        %859 = vmatprep.subr.mxu0 0.0
        %860 = vmatpush1.msra.mxu0 0.0
        %861 = vmatprep.subr.mxu0 0.0
        %862 = vmatpush1.msra.mxu0 0.0
        %863 = vmatprep.subr.mxu0 0.0
        %864 = vmatpush1.msra.mxu0 0.0
        %865 = vmatprep.subr.mxu0 0.0
        %866 = vmatpush1.msra.mxu0 0.0
        %867 = vmatprep.subr.mxu0 0.0
        %868 = vmatpush1.msra.mxu0 0.0
        %869 = vmatprep.subr.mxu0 0.0
        %870 = vmatpush1.msra.mxu0 0.0
        %871 = vmatprep.subr.mxu0 0.0
        %872 = vmatpush1.msra.mxu0 0.0
        %873 = vmatprep.subr.mxu0 0.0
        %874 = vmatpush1.msra.mxu0 0.0
        %875 = vmatprep.subr.mxu0 0.0
        %876 = vmatpush1.msra.mxu0 0.0
        %877 = vmatprep.subr.mxu0 0.0
        %878 = vmatpush1.msra.mxu0 0.0
        %879 = vmatprep.subr.mxu0 0.0
        %880 = vmatpush1.msra.mxu0 0.0
        %881 = vmatprep.subr.mxu0 0.0
        %882 = vmatpush1.msra.mxu0 0.0
        %883 = vmatprep.subr.mxu0 0.0
        %884 = vmatpush1.msra.mxu0 0.0
        %885 = vmatprep.subr.mxu0 0.0
        %886 = vmatpush1.msra.mxu0 0.0
        %887 = vmatprep.subr.mxu0 0.0
        %888 = vmatpush1.msra.mxu0 0.0
        %889 = vmatprep.subr.mxu0 0.0
        %890 = vmatpush1.msra.mxu0 0.0
        %891 = vmatprep.subr.mxu0 0.0
        %892 = vmatpush1.msra.mxu0 0.0
        %893 = vmatprep.mubr.f32.mxu0 0.0
        %894 = vmatmul.mubr.f32.gmra.mrb[0].mxu0 %v827
        %v895 = vpop.f32.mrb[0].mxu0
        %v896 = vadd.f32 %v825, %v895
        %v897 = vpop.f32.mrb[0].mxu0
        %898 = vdwg.mxu0
        %vm899 = vcmp.gt.f32.partialorder %v896, 0.0
        %v900 = vmul.f32 %v896, 0.01
        %v901 = vsel %vm899, %v896, %v900
        %vm902 = vcmask 39936
        %v903 = vsel %vm902, %v901, -inf
        %904 = vmax.xlane.f32.xlu0 %v903
        %v905 = vpop.xlane.xlu0 %904
        %v906 = vsub.f32 %v901, %v905
        %v907 = vmul.f32 %v906, 1.442695
        %v908 = vpow.pop %v907
        %v909 = vsel %vm902, %v908, 0.0
        %910 = vadd.xlane.f32.xlu0 %v909
        %v911 = vpop.xlane.xlu0 %910
        %v912 = vrcp.pop %v911
        %v913 = vmul.f32 %v908, %v912
        %v914 = vlog2.pop %v911
        %v915 = vmul.f32 %v914, 0.6931472
        %v916 = vsub.f32 %v906, %v915
        %v917 = vadd.f32 %v913, 0.0
        %vm918 = vcmp.gt.f32.partialorder %v482, %v917
        %v919 = vsel %vm918, 1, 0
        %921 = vrot.lane.b32.xlu0 %v913, 127
        %v922 = vpop.permute.xlu0 %921
        %v924 = vadd.f32 %v917, %v922
        %vm925 = vcmp.gt.f32.partialorder %v482, %v924
        %v926 = vsel %vm925, 1, 0
        %v927 = vadd.s32 %v919, %v926
        %928 = vrot.lane.b32.xlu0 %v913, 126
        %v929 = vpop.permute.xlu0 %928
        %v931 = vadd.f32 %v924, %v929
        %vm932 = vcmp.gt.f32.partialorder %v482, %v931
        %v933 = vsel %vm932, 1, 0
        %v934 = vadd.s32 %v927, %v933
        %935 = vrot.lane.b32.xlu0 %v913, 125
        %v936 = vpop.permute.xlu0 %935
        %v938 = vadd.f32 %v931, %v936
        %vm939 = vcmp.gt.f32.partialorder %v482, %v938
        %v940 = vsel %vm939, 1, 0
        %v941 = vadd.s32 %v934, %v940
        %v942 = vlaneseq
        %v943 = vand.u32 %v942, 127
        %944 = vset.pattern.permute.xlu0 0
        %945 = vperm.xlu0 %944, %v941
        %v946 = vpop.permute.xlu0 %945
        %vm947 = vcmp.eq.s32.totalorder %v943, %v946
        %v948 = vsel %vm947, 1, 0
        %v949 = vcvt.s32.f32 %v948
        %v950 = vmul.f32 %v916, %v949
        %v951 = vsel %vm902, %v950, 0.0
        %952 = vadd.xlane.f32.xlu0 %v951
        %v953 = vpop.xlane.xlu0 %952
        %v954 = vcvt.s32.f32 %v941
        %955 = vrot.lane.b32.xlu0 %v913, 5
        %v956 = vpop.permute.xlu0 %955
        %959 = vrot.lane.b32.xlu0 %v916, 10
        %v960 = vpop.permute.xlu0 %959
        %963 = vrot.lane.b32.xlu0 %v901, 15
        %v964 = vpop.permute.xlu0 %963
        %967 = vrot.lane.b32.xlu0 %v954, 20
        %v968 = vpop.permute.xlu0 %967
        %v970 = vsel %vm902, %v949, %v956
        %vm971 = vcmask 80896
        %v972 = vsel %vm971, %v970, %v960
        %vm973 = vcmask 121856
        %v974 = vsel %vm973, %v972, %v964
        %v975 = vsel %vm494, %v974, %v968
        %vm976 = vcmask 171008
        %v977 = vsel %vm976, %v975, %v953
        %vm978 = vcmask 179200
        %v979 = vsel %vm978, %v977, 0.0
        %980 = vst [vmem:[%s473] sm:$0xff] %v979
        %p981 = scmp.lt.s32.totalorder %s29, 7
        %s982 = scalar_select %p981, %s29, 7
        %s983 = smul.addr %s982, 8
        %s984 = scalar_lea.vmem %s11, %s983
        // Predicated region
        $region81: #{gru_discrete_policy_forward_seq.1} parent=63 // pred_check
          %p985 = pneg %p288
        $region82: #{gru_discrete_policy_forward_seq.1} parent=63 // pred_check_branch
          %987 = sbr.rel (%p985) target = $region84
        $region83: #{gru_discrete_policy_forward_seq.1} parent=63 // pred_region
          _
        $region84: #{gru_discrete_policy_forward_seq.1} parent=63 // pred_fallthru
          _
        // Predicated region
        $region85: #{gru_discrete_policy_forward_seq.1} parent=63 // pred_check
          %p988 = pneg %p309
        $region86: #{gru_discrete_policy_forward_seq.1} parent=63 // pred_check_branch
          %990 = sbr.rel (%p988) target = $region88
        $region87: #{gru_discrete_policy_forward_seq.1} parent=63 // pred_region
          %s992 = ssub.s32 128, 128
          %993 = vsyncadd [#allocation4], %s992
          %s995 = sshll.u32 [#allocation8], 4
          %s996 = int_to_ptr.vmem [resolvable:$true] %s995
          %998 = dma.vmem_to_hbm [thread:$0]  %s996, 128, %s12, [#allocation4]
        $region88: #{gru_discrete_policy_forward_seq.1} parent=63 // pred_fallthru
          _
        // Predicated region
        $region89: #{gru_discrete_policy_forward_seq.1} parent=63 // pred_check
          %p999 = pneg %p309
        $region90: #{gru_discrete_policy_forward_seq.1} parent=63 // pred_check_branch
          %1001 = sbr.rel (%p999) target = $region92
        $region91: #{gru_discrete_policy_forward_seq.1} parent=63 // pred_region
          %1002 = dma.done [#allocation4], 128
        $region92: #{gru_discrete_policy_forward_seq.1} parent=63 // pred_fallthru
          _
      $region64: #{gru_discrete_policy_forward_seq.1} parent=5 // pred_fallthru
        _
      %p1003 = scmp.le.s32.totalorder 2, %s24
      // Predicated region
      $region93: #{gru_discrete_policy_forward_seq.1} parent=5 // pred_check
        %p1004 = pneg %p1003
      $region94: #{gru_discrete_policy_forward_seq.1} parent=5 // pred_check_branch
        %1006 = sbr.rel (%p1004) target = $region96
      $region95: #{gru_discrete_policy_forward_seq.1} parent=5 // pred_region
        %s1007 = ssub.s32 %s24, 2
        // Predicated region
        $region97: #{gru_discrete_policy_forward_seq.1} parent=95 // pred_check
          %p1008 = pneg %p294
        $region98: #{gru_discrete_policy_forward_seq.1} parent=95 // pred_check_branch
          %1010 = sbr.rel (%p1008) target = $region100
        $region99: #{gru_discrete_policy_forward_seq.1} parent=95 // pred_region
          %p1011 = scmp.lt.s32.totalorder %s30, 7
          %s1012 = scalar_select %p1011, %s30, 7
          %s1013 = smul.addr %s1012, 8
          %s1014 = scalar_lea.vmem %s11, %s1013
        $region100: #{gru_discrete_policy_forward_seq.1} parent=95 // pred_fallthru
          _
      $region96: #{gru_discrete_policy_forward_seq.1} parent=5 // pred_fallthru
        _
    $region6: #{gru_discrete_policy_forward_seq.1} parent=1 // loop_footer
      %s28 = sadd.s32 1, %s24
    $region7: #{gru_discrete_policy_forward_seq.1} parent=1 // loop_footer_branch
      %23 = sbr.rel target = $region3
    $region8: #{gru_discrete_policy_forward_seq.1} parent=1 // loop_exit
      _
    %1015 = vsyncpa [#allocation3], 1
    %s1016 = scalar_lea.sflag [#allocation3], 1
    %1017 = vsyncpa %s1016, 1
    %1018 = vsyncpa [#allocation6], 1
    %1019 = vsyncpa [#allocation4], 1
    %s1020 = scalar_lea.sflag [#allocation4], 1
    %1021 = vsyncpa %s1020, 1

</llo_original>
